<compile_context>
chip_gen: v5e
topology: v5e:2x2
jax: 0.10.0
libtpu: 0.0.40
codegen_flags: <defaults>
</compile_context>

<pallas_src>
import jax
import jax.numpy as jnp
from jax.experimental import pallas as pl
from jax.experimental.pallas import tpu as pltpu

# ---- Bias packing offsets (8-aligned sublane segments). Single source of
# ---- truth shared by the kernel, init_params and the reference.
_B1_OFF, _B1_N = 0, 20
_B2_OFF, _B2_N = 24, 50
_B3_OFF, _B3_N = 80, 20
_BH_OFF, _BH_N = 104, 2
_B_PACKED_ROWS = 112


def mlp_kernel(x_ref, w1_ref, w2_ref, w3_ref, wh_ref, b_ref, out_ref):
    # x_ref: (1, TB) -- batch on lanes.
    x = x_ref[...]

    b1 = b_ref[_B1_OFF:_B1_OFF + _B1_N, :]   # (20, 1)
    b2 = b_ref[_B2_OFF:_B2_OFF + _B2_N, :]   # (50, 1)
    b3 = b_ref[_B3_OFF:_B3_OFF + _B3_N, :]   # (20, 1)
    bh = b_ref[_BH_OFF:_BH_OFF + _BH_N, :]   # (2, 1)

    # hidden1: K=1 contraction as a VPU outer product (f32).
    # (20,1) * (1,TB) + (20,1) -> (20,TB)
    h = jnp.maximum(w1_ref[...] * x + b1, 0.0)

    # Explicit single-pass bf16 MXU operands; f32 accumulation & epilogues.
    w2 = w2_ref[...].astype(jnp.bfloat16)
    w3 = w3_ref[...].astype(jnp.bfloat16)
    wh = wh_ref[...].astype(jnp.bfloat16)

    # hidden2: (50,20) @ (20,TB) + (50,1) -> relu
    h = jnp.maximum(
        jnp.dot(w2, h.astype(jnp.bfloat16),
                preferred_element_type=jnp.float32) + b2, 0.0)

    # hidden3: (20,50) @ (50,TB) + (20,1) -> relu
    h = jnp.maximum(
        jnp.dot(w3, h.astype(jnp.bfloat16),
                preferred_element_type=jnp.float32) + b3, 0.0)

    # fused heads: (2,20) @ (20,TB) + (2,1) -> (2,TB)
    # row 0 = mean, row 1 = log_sigma
    out_ref[...] = (
        jnp.dot(wh, h.astype(jnp.bfloat16),
                preferred_element_type=jnp.float32) + bh
    ).astype(out_ref.dtype)


def _round_up(n, m):
    return ((n + m - 1) // m) * m


def mlp_forward(x, params, *, tile_b=8192):
    """x: (B, 1) float32. params: dict from init_params.
    Returns (mean, log_sigma), each (B, 1) float32."""
    B = x.shape[0]
    B_pad = _round_up(B, 128)                     # lane alignment only
    TB = min(_round_up(tile_b, 128), B_pad)
    # v7x has 2 TensorCores: keep >= 2 grid steps when the batch allows it so
    # the "parallel" axis actually shards across cores.
    if TB >= B_pad and B_pad >= 256:
        TB = _round_up((B_pad + 1) // 2, 128)
    n_steps = pl.cdiv(B_pad, TB)                  # ragged final block allowed

    # Batch onto the lane axis; pad only if B isn't already 128-aligned.
    xt = x.astype(jnp.float32).reshape(1, B)
    if B_pad != B:
        xt = jnp.pad(xt, ((0, 0), (0, B_pad - B)))

    cost = pl.CostEstimate(
        flops=2 * B_pad * (1 * 20 + 20 * 50 + 50 * 20 + 20 * 2),
        transcendentals=0,
        bytes_accessed=4 * B_pad * 3
        + 4 * (20 + 1000 + 1000 + 40 + _B_PACKED_ROWS),
    )

    out = pl.pallas_call(
        mlp_kernel,
        out_shape=jax.ShapeDtypeStruct((2, B_pad), jnp.float32),
        grid=(n_steps,),
        in_specs=[
            pl.BlockSpec((1, TB), lambda i: (0, i)),              # x tile
            pl.BlockSpec((20, 1), lambda i: (0, 0)),              # w1 (resident)
            pl.BlockSpec((50, 20), lambda i: (0, 0)),             # w2 (resident)
            pl.BlockSpec((20, 50), lambda i: (0, 0)),             # w3 (resident)
            pl.BlockSpec((2, 20), lambda i: (0, 0)),              # fused heads
            pl.BlockSpec((_B_PACKED_ROWS, 1), lambda i: (0, 0)),  # packed biases
        ],
        out_specs=pl.BlockSpec((2, TB), lambda i: (0, i)),
        compiler_params=pltpu.CompilerParams(
            dimension_semantics=("parallel",),    # megacore sharding on v7x
        ),
        cost_estimate=cost,
    )(xt, params["w1"], params["w2"], params["w3"], params["wh"], params["b"])

    mean = out[0, :B].reshape(B, 1)
    log_sigma = out[1, :B].reshape(B, 1)
    return mean, log_sigma


def init_params(key):
    """PyTorch-Linear-style init: U(-1/sqrt(fan_in), 1/sqrt(fan_in)).
    Weights stored in PyTorch's native (out_features, in_features) layout."""
    def linear(key, fan_in, fan_out):
        kw, kb = jax.random.split(key)
        bound = 1.0 / (fan_in ** 0.5)
        w = jax.random.uniform(kw, (fan_out, fan_in), jnp.float32, -bound, bound)
        b = jax.random.uniform(kb, (fan_out,), jnp.float32, -bound, bound)
        return w, b

    k1, k2, k3, km, ks = jax.random.split(key, 5)
    w1, b1 = linear(k1, 1, 20)     # (20, 1)
    w2, b2 = linear(k2, 20, 50)    # (50, 20)
    w3, b3 = linear(k3, 50, 20)    # (20, 50)
    wm, bm = linear(km, 20, 1)     # (1, 20)
    ws, bs = linear(ks, 20, 1)     # (1, 20)

    wh = jnp.concatenate([wm, ws], axis=0)                 # (2, 20) fused head
    b_packed = jnp.zeros((_B_PACKED_ROWS, 1), jnp.float32)
    b_packed = b_packed.at[_B1_OFF:_B1_OFF + _B1_N, 0].set(b1)
    b_packed = b_packed.at[_B2_OFF:_B2_OFF + _B2_N, 0].set(b2)
    b_packed = b_packed.at[_B3_OFF:_B3_OFF + _B3_N, 0].set(b3)
    b_packed = b_packed.at[_BH_OFF:_BH_OFF + 1, 0].set(bm)
    b_packed = b_packed.at[_BH_OFF + 1:_BH_OFF + 2, 0].set(bs)

    return dict(w1=w1, w2=w2, w3=w3, wh=wh, b=b_packed)


def mlp_reference(x, p):
    """Pure-JAX f32 reference with PyTorch Linear semantics (y = x @ W^T + b)."""
    b1 = p["b"][_B1_OFF:_B1_OFF + _B1_N, 0]
    b2 = p["b"][_B2_OFF:_B2_OFF + _B2_N, 0]
    b3 = p["b"][_B3_OFF:_B3_OFF + _B3_N, 0]
    bh = p["b"][_BH_OFF:_BH_OFF + _BH_N, 0]
    hp = "highest"
    h = jax.nn.relu(jnp.dot(x, p["w1"].T, precision=hp) + b1)
    h = jax.nn.relu(jnp.dot(h, p["w2"].T, precision=hp) + b2)
    h = jax.nn.relu(jnp.dot(h, p["w3"].T, precision=hp) + b3)
    out = jnp.dot(h, p["wh"].T, precision=hp) + bh
    return out[:, 0:1], out[:, 1:2]


if __name__ == "__main__":
    key = jax.random.PRNGKey(0)
    k_params, k_x = jax.random.split(key)

    params = init_params(k_params)
    x = jax.random.normal(k_x, (8, 1), dtype=jnp.float32)  # batch=8, 1 feature

    mean, log_sigma = jax.jit(mlp_forward)(x, params)
    jax.block_until_ready((mean, log_sigma))

    mean_ref, log_sigma_ref = mlp_reference(x, params)
    assert mean.shape == (8, 1) and log_sigma.shape == (8, 1)
    # Kernel uses single-pass bf16 MXU operands (f32 accumulation); reference
    # is full-f32 (precision=highest), so tolerance is bf16-appropriate.
    assert jnp.allclose(mean, mean_ref, atol=5e-2, rtol=5e-2)
    assert jnp.allclose(log_sigma, log_sigma_ref, atol=5e-2, rtol=5e-2)

    print("KERNEL_OK")
</pallas_src>

<mosaic_0001>
module attributes {stable_mosaic.version = 11 : i64} {
  func.func @mlp_kernel(%arg0: i32, %arg1: memref<1x128xf32, #tpu.memory_space<vmem>>, %arg2: memref<20x1xf32, #tpu.memory_space<vmem>>, %arg3: memref<50x20xf32, #tpu.memory_space<vmem>>, %arg4: memref<20x50xf32, #tpu.memory_space<vmem>>, %arg5: memref<2x20xf32, #tpu.memory_space<vmem>>, %arg6: memref<112x1xf32, #tpu.memory_space<vmem>>, %arg7: memref<2x128xf32, #tpu.memory_space<vmem>>) attributes {dimension_semantics = [#tpu.dimension_semantics<parallel>], iteration_bounds = array<i64: 1>, scalar_prefetch = 0 : i64, scratch_operands = 0 : i64, tpu.core_type = #tpu.core_type<tc>, window_params = [{transform_indices = @transform_0, window_bounds = array<i64: 1, 128>}, {pipeline_mode = #tpu.pipeline_mode<synchronous>, transform_indices = @transform_1, window_bounds = array<i64: 20, 1>}, {pipeline_mode = #tpu.pipeline_mode<synchronous>, transform_indices = @transform_2, window_bounds = array<i64: 50, 20>}, {pipeline_mode = #tpu.pipeline_mode<synchronous>, transform_indices = @transform_3, window_bounds = array<i64: 20, 50>}, {pipeline_mode = #tpu.pipeline_mode<synchronous>, transform_indices = @transform_4, window_bounds = array<i64: 2, 20>}, {pipeline_mode = #tpu.pipeline_mode<synchronous>, transform_indices = @transform_5, window_bounds = array<i64: 112, 1>}, {transform_indices = @transform_6, window_bounds = array<i64: 2, 128>}]} {
    %c0 = arith.constant 0 : index
    %c0_0 = arith.constant 0 : index
    %0 = vector.load %arg1[%c0, %c0_0] : memref<1x128xf32, #tpu.memory_space<vmem>>, vector<1x128xf32>
    %c0_1 = arith.constant 0 : index
    %c0_2 = arith.constant 0 : index
    %1 = vector.load %arg6[%c0_1, %c0_2] : memref<112x1xf32, #tpu.memory_space<vmem>>, vector<20x1xf32>
    %c24 = arith.constant 24 : index
    %c0_3 = arith.constant 0 : index
    %2 = vector.load %arg6[%c24, %c0_3] : memref<112x1xf32, #tpu.memory_space<vmem>>, vector<50x1xf32>
    %c80 = arith.constant 80 : index
    %c0_4 = arith.constant 0 : index
    %3 = vector.load %arg6[%c80, %c0_4] : memref<112x1xf32, #tpu.memory_space<vmem>>, vector<20x1xf32>
    %c104 = arith.constant 104 : index
    %c0_5 = arith.constant 0 : index
    %4 = vector.load %arg6[%c104, %c0_5] : memref<112x1xf32, #tpu.memory_space<vmem>>, vector<2x1xf32>
    %c0_6 = arith.constant 0 : index
    %c0_7 = arith.constant 0 : index
    %5 = vector.load %arg2[%c0_6, %c0_7] : memref<20x1xf32, #tpu.memory_space<vmem>>, vector<20x1xf32>
    %6 = vector.broadcast %5 : vector<20x1xf32> to vector<20x128xf32>
    %7 = vector.broadcast %0 : vector<1x128xf32> to vector<20x128xf32>
    %8 = arith.mulf %6, %7 : vector<20x128xf32>
    %9 = vector.broadcast %1 : vector<20x1xf32> to vector<20x128xf32>
    %10 = arith.addf %8, %9 : vector<20x128xf32>
    %cst = arith.constant 0.000000e+00 : f32
    %11 = vector.broadcast %cst : f32 to vector<20x128xf32>
    %12 = arith.maximumf %10, %11 : vector<20x128xf32>
    %c0_8 = arith.constant 0 : index
    %c0_9 = arith.constant 0 : index
    %13 = vector.load %arg3[%c0_8, %c0_9] : memref<50x20xf32, #tpu.memory_space<vmem>>, vector<50x20xf32>
    %14 = arith.truncf %13 : vector<50x20xf32> to vector<50x20xbf16>
    %c0_10 = arith.constant 0 : index
    %c0_11 = arith.constant 0 : index
    %15 = vector.load %arg4[%c0_10, %c0_11] : memref<20x50xf32, #tpu.memory_space<vmem>>, vector<20x50xf32>
    %16 = arith.truncf %15 : vector<20x50xf32> to vector<20x50xbf16>
    %c0_12 = arith.constant 0 : index
    %c0_13 = arith.constant 0 : index
    %17 = vector.load %arg5[%c0_12, %c0_13] : memref<2x20xf32, #tpu.memory_space<vmem>>, vector<2x20xf32>
    %18 = arith.truncf %17 : vector<2x20xf32> to vector<2x20xbf16>
    %19 = arith.truncf %12 : vector<20x128xf32> to vector<20x128xbf16>
    %cst_14 = arith.constant dense<0.000000e+00> : vector<50x128xf32>
    %20 = tpu.matmul %14, %19, %cst_14 {dimension_numbers = #tpu.dot_dimension_numbers<[1], [0], [0], [1], [0, 0, 1, 1], [], []>} : vector<50x20xbf16>, vector<20x128xbf16>, vector<50x128xf32> -> vector<50x128xf32>
    %21 = vector.broadcast %2 : vector<50x1xf32> to vector<50x128xf32>
    %22 = arith.addf %20, %21 : vector<50x128xf32>
    %cst_15 = arith.constant 0.000000e+00 : f32
    %23 = vector.broadcast %cst_15 : f32 to vector<50x128xf32>
    %24 = arith.maximumf %22, %23 : vector<50x128xf32>
    %25 = arith.truncf %24 : vector<50x128xf32> to vector<50x128xbf16>
    %cst_16 = arith.constant dense<0.000000e+00> : vector<20x128xf32>
    %26 = tpu.matmul %16, %25, %cst_16 {dimension_numbers = #tpu.dot_dimension_numbers<[1], [0], [0], [1], [0, 0, 1, 1], [], []>} : vector<20x50xbf16>, vector<50x128xbf16>, vector<20x128xf32> -> vector<20x128xf32>
    %27 = vector.broadcast %3 : vector<20x1xf32> to vector<20x128xf32>
    %28 = arith.addf %26, %27 : vector<20x128xf32>
    %cst_17 = arith.constant 0.000000e+00 : f32
    %29 = vector.broadcast %cst_17 : f32 to vector<20x128xf32>
    %30 = arith.maximumf %28, %29 : vector<20x128xf32>
    %31 = arith.truncf %30 : vector<20x128xf32> to vector<20x128xbf16>
    %cst_18 = arith.constant dense<0.000000e+00> : vector<2x128xf32>
    %32 = tpu.matmul %18, %31, %cst_18 {dimension_numbers = #tpu.dot_dimension_numbers<[1], [0], [0], [1], [0, 0, 1, 1], [], []>} : vector<2x20xbf16>, vector<20x128xbf16>, vector<2x128xf32> -> vector<2x128xf32>
    %33 = vector.broadcast %4 : vector<2x1xf32> to vector<2x128xf32>
    %34 = arith.addf %32, %33 : vector<2x128xf32>
    %c0_19 = arith.constant 0 : index
    %c0_20 = arith.constant 0 : index
    %35 = vector.load %arg7[%c0_19, %c0_20] : memref<2x128xf32, #tpu.memory_space<vmem>>, vector<2x128xf32>
    tpu.vector_store %arg7[%c0_19, %c0_20], %34 {strides = array<i32>} : memref<2x128xf32, #tpu.memory_space<vmem>>, vector<2x128xf32>,
    return
  }
  func.func @transform_0(%arg0: i32) -> (i32, i32) {
    %c0_i32 = arith.constant 0 : i32
    %c0_i32_0 = arith.constant 0 : i32
    return %c0_i32, %arg0 : i32, i32
  }
  func.func @transform_1(%arg0: i32) -> (i32, i32) {
    %c0_i32 = arith.constant 0 : i32
    %c0_i32_0 = arith.constant 0 : i32
    %c0_i32_1 = arith.constant 0 : i32
    return %c0_i32, %c0_i32_0 : i32, i32
  }
  func.func @transform_2(%arg0: i32) -> (i32, i32) {
    %c0_i32 = arith.constant 0 : i32
    %c0_i32_0 = arith.constant 0 : i32
    %c0_i32_1 = arith.constant 0 : i32
    return %c0_i32, %c0_i32_0 : i32, i32
  }
  func.func @transform_3(%arg0: i32) -> (i32, i32) {
    %c0_i32 = arith.constant 0 : i32
    %c0_i32_0 = arith.constant 0 : i32
    %c0_i32_1 = arith.constant 0 : i32
    return %c0_i32, %c0_i32_0 : i32, i32
  }
  func.func @transform_4(%arg0: i32) -> (i32, i32) {
    %c0_i32 = arith.constant 0 : i32
    %c0_i32_0 = arith.constant 0 : i32
    %c0_i32_1 = arith.constant 0 : i32
    return %c0_i32, %c0_i32_0 : i32, i32
  }
  func.func @transform_5(%arg0: i32) -> (i32, i32) {
    %c0_i32 = arith.constant 0 : i32
    %c0_i32_0 = arith.constant 0 : i32
    %c0_i32_1 = arith.constant 0 : i32
    return %c0_i32, %c0_i32_0 : i32, i32
  }
  func.func @transform_6(%arg0: i32) -> (i32, i32) {
    %c0_i32 = arith.constant 0 : i32
    %c0_i32_0 = arith.constant 0 : i32
    return %c0_i32, %arg0 : i32, i32
  }
}

</mosaic_0001>

<llo_original>
// kernel: mlp_forward.1
$region0: #{mlp_forward.1}
  #allocation0 [shape = 'u32[]', space=smem, size = 0x4, offset = 0x4, fixed_abs, tag = 'smem constant byte address 0x4 - core index']
  #allocation1 [shape = 'u32[72,128]{1,0:T(1,128)}', space=vmem, size = 0x9000, scoped, tag = 'internal scratch']
  %s0 = inlined_call_operand.vmem [shape: f32[1,128], index: 0, kind: input, shape index: {}]
  %s1 = inlined_call_operand.vmem [shape: f32[20,1], index: 1, kind: input, shape index: {}]
  %s2 = inlined_call_operand.vmem [shape: f32[50,20], index: 2, kind: input, shape index: {}]
  %s3 = inlined_call_operand.vmem [shape: f32[20,50], index: 3, kind: input, shape index: {}]
  %s4 = inlined_call_operand.vmem [shape: f32[2,20], index: 4, kind: input, shape index: {}]
  %s5 = inlined_call_operand.vmem [shape: f32[112,1], index: 5, kind: input, shape index: {}]
  %s6 = inlined_call_operand.vmem [shape: f32[2,128], index: 6, kind: output, shape index: {}]
  %s7 = sld [smem:[#allocation0]]
  $region34: #{mlp_forward.1} parent=0
    _
  %s9 = ssub.s32 1, %s7
  %s10 = scalar_select 0, %s9, %s7
  // Predicated region
  $region2: #{mlp_forward.1} parent=0 // pred_check
    _
  $region3: #{mlp_forward.1} parent=0 // pred_check_branch
    %12 = sbr.rel (0) target = $region5
  $region4: #{mlp_forward.1} parent=0 // pred_region
    _
  $region5: #{mlp_forward.1} parent=0 // pred_fallthru
    _
  // Predicated region
  $region6: #{mlp_forward.1} parent=0 // pred_check
    _
  $region7: #{mlp_forward.1} parent=0 // pred_check_branch
    %14 = sbr.rel (0) target = $region9
  $region8: #{mlp_forward.1} parent=0 // pred_region
    _
  $region9: #{mlp_forward.1} parent=0 // pred_fallthru
    _
  // Predicated region
  $region10: #{mlp_forward.1} parent=0 // pred_check
    _
  $region11: #{mlp_forward.1} parent=0 // pred_check_branch
    %16 = sbr.rel (0) target = $region13
  $region12: #{mlp_forward.1} parent=0 // pred_region
    _
  $region13: #{mlp_forward.1} parent=0 // pred_fallthru
    _
  // Predicated region
  $region14: #{mlp_forward.1} parent=0 // pred_check
    _
  $region15: #{mlp_forward.1} parent=0 // pred_check_branch
    %18 = sbr.rel (0) target = $region17
  $region16: #{mlp_forward.1} parent=0 // pred_region
    _
  $region17: #{mlp_forward.1} parent=0 // pred_fallthru
    _
  // Predicated region
  $region18: #{mlp_forward.1} parent=0 // pred_check
    _
  $region19: #{mlp_forward.1} parent=0 // pred_check_branch
    %20 = sbr.rel (0) target = $region21
  $region20: #{mlp_forward.1} parent=0 // pred_region
    _
  $region21: #{mlp_forward.1} parent=0 // pred_fallthru
    _
  // Predicated region
  $region22: #{mlp_forward.1} parent=0 // pred_check
    _
  $region23: #{mlp_forward.1} parent=0 // pred_check_branch
    %22 = sbr.rel (0) target = $region25
  $region24: #{mlp_forward.1} parent=0 // pred_region
    _
  $region25: #{mlp_forward.1} parent=0 // pred_fallthru
    _
  %v24 = vld [vmem:[%s0] sm:$0x1]
  %v25 = vld [vmem:[%s5] sm:$0xff]
  %v26 = vld [vmem:[%s5 + $0x8] sm:$0xff]
  %v27 = vld [vmem:[%s5 + $0x10] sm:$0xf]
  %v28 = vld [vmem:[%s5 + $0x18] sm:$0xff]
  %v29 = vld [vmem:[%s5 + $0x20] sm:$0xff]
  %v30 = vld [vmem:[%s5 + $0x28] sm:$0xff]
  %v31 = vld [vmem:[%s5 + $0x30] sm:$0xff]
  %v32 = vld [vmem:[%s5 + $0x38] sm:$0xff]
  %v33 = vld [vmem:[%s5 + $0x40] sm:$0xff]
  %v34 = vld [vmem:[%s5 + $0x48] sm:$0x3]
  %v35 = vld [vmem:[%s5 + $0x50] sm:$0xff]
  %v36 = vld [vmem:[%s5 + $0x58] sm:$0xff]
  %v37 = vld [vmem:[%s5 + $0x60] sm:$0xf]
  %v38 = vld [vmem:[%s5 + $0x68] sm:$0x3]
  %v39 = vld [vmem:[%s1] sm:$0xff]
  %v40 = vld [vmem:[%s1 + $0x8] sm:$0xff]
  %v41 = vld [vmem:[%s1 + $0x10] sm:$0xf]
  %43 = vset.pattern.permute.xlu0 0
  %44 = vperm.xlu0 %43, %v39
  %v45 = vpop.permute.xlu0 %44
  %48 = vset.pattern.permute.xlu0 0
  %49 = vperm.xlu0 %48, %v40
  %v50 = vpop.permute.xlu0 %49
  %53 = vset.pattern.permute.xlu0 0
  %54 = vperm.xlu0 %53, %v41
  %v55 = vpop.permute.xlu0 %54
  %v58 = vperm.slane %v24, 0
  %v60 = vmul.f32 %v45, %v58
  %v61 = vmul.f32 %v50, %v58
  %v62 = vmul.f32 %v55, %v58
  %64 = vset.pattern.permute.xlu0 0
  %65 = vperm.xlu0 %64, %v25
  %v66 = vpop.permute.xlu0 %65
  %69 = vset.pattern.permute.xlu0 0
  %70 = vperm.xlu0 %69, %v26
  %v71 = vpop.permute.xlu0 %70
  %74 = vset.pattern.permute.xlu0 0
  %75 = vperm.xlu0 %74, %v27
  %v76 = vpop.permute.xlu0 %75
  %v78 = vadd.f32 %v60, %v66
  %v79 = vadd.f32 %v61, %v71
  %v80 = vadd.f32 %v62, %v76
  %v81 = vmax.f32 %v78, 0.0
  %v82 = vmax.f32 %v79, 0.0
  %v83 = vmax.f32 %v80, 0.0
  %v84 = vld [vmem:[%s2] sm:$0xff]
  %v85 = vld [vmem:[%s2 + $0x8] sm:$0xff]
  %v86 = vld [vmem:[%s2 + $0x10] sm:$0xff]
  %v87 = vld [vmem:[%s2 + $0x18] sm:$0xff]
  %v88 = vld [vmem:[%s2 + $0x20] sm:$0xff]
  %v89 = vld [vmem:[%s2 + $0x28] sm:$0xff]
  %v90 = vld [vmem:[%s2 + $0x30] sm:$0x3]
  %v91 = vpack.c.bf16 %v85, %v84
  %v92 = vpack.c.bf16 %v87, %v86
  %v93 = vpack.c.bf16 %v89, %v88
  %v94 = vpack.c.bf16 %v90, %v90
  %v95 = vld [vmem:[%s3] sm:$0xff]
  %v96 = vld [vmem:[%s3 + $0x8] sm:$0xff]
  %v97 = vld [vmem:[%s3 + $0x10] sm:$0xf]
  %v98 = vpack.c.bf16 %v96, %v95
  %v99 = vpack.c.bf16 %v97, %v97
  %v100 = vld [vmem:[%s4] sm:$0x3]
  %v101 = vpack.c.bf16 %v100, %v100
  %v102 = vpack.c.bf16 %v82, %v81
  %v103 = vpack.c.bf16 %v83, %v83
  %105 = vset.pattern.permute.xlu0 0
  %106 = vperm.xlu0 %105, %v28
  %v107 = vpop.permute.xlu0 %106
  %110 = vset.pattern.permute.xlu0 0
  %111 = vperm.xlu0 %110, %v29
  %v112 = vpop.permute.xlu0 %111
  %115 = vset.pattern.permute.xlu0 0
  %116 = vperm.xlu0 %115, %v30
  %v117 = vpop.permute.xlu0 %116
  %120 = vset.pattern.permute.xlu0 0
  %121 = vperm.xlu0 %120, %v31
  %v122 = vpop.permute.xlu0 %121
  %125 = vset.pattern.permute.xlu0 0
  %126 = vperm.xlu0 %125, %v32
  %v127 = vpop.permute.xlu0 %126
  %130 = vset.pattern.permute.xlu0 0
  %131 = vperm.xlu0 %130, %v33
  %v132 = vpop.permute.xlu0 %131
  %135 = vset.pattern.permute.xlu0 0
  %136 = vperm.xlu0 %135, %v34
  %v137 = vpop.permute.xlu0 %136
  %vm139 = vcmask 162816
  %v141 = vsel %vm139, %v91, 0
  %v144 = vsel %vm139, %v92, 0
  %v147 = vsel %vm139, %v93, 0
  %v150 = vsel %vm139, %v94, 0
  %vm152 = vcmask 1041408
  %v154 = vsel %vm152, %v103, 0
  %156 = vmatpush.bf16.msra.mxu0 0
  %157 = vmatpush.bf16.msra.mxu0 0
  %158 = vmatpush.bf16.msra.mxu0 0
  %159 = vmatpush.bf16.msra.mxu0 0
  %160 = vmatpush.bf16.msra.mxu0 0
  %161 = vmatpush.bf16.msra.mxu0 0
  %162 = vmatpush.bf16.msra.mxu0 %v154
  %163 = vmatpush.bf16.msra.mxu0 %v102
  %164 = vmatmul.bf16.gmra.mxu0 %v141
  %v165 = vpop.f32.mrf.mxu0
  %v166 = vadd.f32 %v107, %v165
  %v167 = vpop.f32.mrf.mxu0
  %v168 = vadd.f32 %v112, %v167
  %169 = vmatmul.bf16.gmra.mxu0 %v144
  %v170 = vpop.f32.mrf.mxu0
  %v171 = vadd.f32 %v117, %v170
  %v172 = vpop.f32.mrf.mxu0
  %v173 = vadd.f32 %v122, %v172
  %174 = vmatmul.bf16.gmra.mxu0 %v147
  %v175 = vpop.f32.mrf.mxu0
  %v176 = vadd.f32 %v127, %v175
  %v177 = vpop.f32.mrf.mxu0
  %v178 = vadd.f32 %v132, %v177
  %179 = vmatmul.bf16.gmra.mxu0 %v150
  %v180 = vpop.f32.mrf.mxu0
  %v181 = vadd.f32 %v137, %v180
  %v182 = vpop.f32.mrf.mxu0
  %183 = vdwg.mxu0
  %v184 = vmax.f32 %v166, 0.0
  %v185 = vmax.f32 %v168, 0.0
  %v186 = vmax.f32 %v171, 0.0
  %v187 = vmax.f32 %v173, 0.0
  %v188 = vmax.f32 %v176, 0.0
  %v189 = vmax.f32 %v178, 0.0
  %v190 = vmax.f32 %v181, 0.0
  %v191 = vpack.c.bf16 %v185, %v184
  %v192 = vpack.c.bf16 %v187, %v186
  %v193 = vpack.c.bf16 %v189, %v188
  %v194 = vpack.c.bf16 %v190, %v190
  %196 = vset.pattern.permute.xlu0 0
  %197 = vperm.xlu0 %196, %v35
  %v198 = vpop.permute.xlu0 %197
  %201 = vset.pattern.permute.xlu0 0
  %202 = vperm.xlu0 %201, %v36
  %v203 = vpop.permute.xlu0 %202
  %206 = vset.pattern.permute.xlu0 0
  %207 = vperm.xlu0 %206, %v37
  %v208 = vpop.permute.xlu0 %207
  %vm210 = vcmask 408576
  %v212 = vsel %vm210, %v98, 0
  %v215 = vsel %vm210, %v99, 0
  %vm217 = vcmask 1040384
  %v219 = vsel %vm217, %v194, 0
  %221 = vmatpush.bf16.msra.mxu0 0
  %222 = vmatpush.bf16.msra.mxu0 0
  %223 = vmatpush.bf16.msra.mxu0 0
  %224 = vmatpush.bf16.msra.mxu0 0
  %225 = vmatpush.bf16.msra.mxu0 %v219
  %226 = vmatpush.bf16.msra.mxu0 %v193
  %227 = vmatpush.bf16.msra.mxu0 %v192
  %228 = vmatpush.bf16.msra.mxu0 %v191
  %229 = vmatmul.bf16.gmra.mxu0 %v212
  %v230 = vpop.f32.mrf.mxu0
  %v231 = vadd.f32 %v198, %v230
  %v232 = vpop.f32.mrf.mxu0
  %v233 = vadd.f32 %v203, %v232
  %234 = vmatmul.bf16.gmra.mxu0 %v215
  %v235 = vpop.f32.mrf.mxu0
  %v236 = vadd.f32 %v208, %v235
  %v237 = vpop.f32.mrf.mxu0
  %238 = vdwg.mxu0
  %v239 = vmax.f32 %v231, 0.0
  %v240 = vmax.f32 %v233, 0.0
  %v241 = vmax.f32 %v236, 0.0
  %v242 = vpack.c.bf16 %v240, %v239
  %v243 = vpack.c.bf16 %v241, %v241
  %245 = vset.pattern.permute.xlu0 0
  %246 = vperm.xlu0 %245, %v38
  %v247 = vpop.permute.xlu0 %246
  %v250 = vsel %vm139, %v101, 0
  %v253 = vsel %vm152, %v243, 0
  %255 = vmatpush.bf16.msra.mxu0 0
  %256 = vmatpush.bf16.msra.mxu0 0
  %257 = vmatpush.bf16.msra.mxu0 0
  %258 = vmatpush.bf16.msra.mxu0 0
  %259 = vmatpush.bf16.msra.mxu0 0
  %260 = vmatpush.bf16.msra.mxu0 0
  %261 = vmatpush.bf16.msra.mxu0 %v253
  %262 = vmatpush.bf16.msra.mxu0 %v242
  %263 = vmatmul.bf16.gmra.mxu0 %v250
  %v264 = vpop.f32.mrf.mxu0
  %v265 = vadd.f32 %v247, %v264
  %v266 = vpop.f32.mrf.mxu0
  %267 = vdwg.mxu0
  %268 = vst [vmem:[%s6] sm:$0x3] %v265
  // Predicated region
  $region26: #{mlp_forward.1} parent=0 // pred_check
    _
  $region27: #{mlp_forward.1} parent=0 // pred_check_branch
    %270 = sbr.rel (0) target = $region29
  $region28: #{mlp_forward.1} parent=0 // pred_region
    _
  $region29: #{mlp_forward.1} parent=0 // pred_fallthru
    _
  // Predicated region
  $region30: #{mlp_forward.1} parent=0 // pred_check
    _
  $region31: #{mlp_forward.1} parent=0 // pred_check_branch
    %272 = sbr.rel (0) target = $region33
  $region32: #{mlp_forward.1} parent=0 // pred_region
    _
  $region33: #{mlp_forward.1} parent=0 // pred_fallthru
    _

</llo_original>
